<compile_context>
chip_gen: v7x
topology: tpu7x:2x2x1
jax: 0.10.0
libtpu: 0.0.40
codegen_flags: <defaults>
</compile_context>

<pallas_src>
import functools

import jax
import jax.numpy as jnp
from jax.experimental import pallas as pl
from jax.experimental.pallas import tpu as pltpu

BOX_DIM = 10
FEATURE_SIZE = 128
HIDDEN_SIZE = 128
BATCH = 64
ROW_TILE = 32


def _box_encoder_kernel(x_ref, wf_ref, bf_ref, w2_ref, out_ref, *, hidden):
    """One row-tile of the BoxEncoder forward pass.

    x_ref  : [TM, 10]      f32   box inputs
    wf_ref : [10, H+F]     bf16  fused weights: lanes [0:H]=mlp1, [H:H+F]=mlp_skip
    bf_ref : [1, H+F]      f32   fused biases:  [0:H]=b1,   [H:H+F]=b_skip + b2
    w2_ref : [H, F]        bf16  mlp2 weights
    out_ref: [TM, F]       f32
    """
    x = x_ref[...]                                            # [TM, 10] f32
    wf = wf_ref[...]                                          # [10, H+F] bf16

    # Single fused projection on the MXU (f32 accumulate), bias add on the VPU.
    proj = jnp.dot(x.astype(wf.dtype), wf,
                   preferred_element_type=jnp.float32) + bf_ref[...]  # [TM, H+F]

    # Static, 128-aligned lane slices (free).
    net = jnp.maximum(proj[:, :hidden], 0.0)                  # relu(mlp1(x))
    skip = proj[:, hidden:]                                   # mlp_skip(x) + b_skip + b2

    # Second projection (mlp2) — bias already folded into `skip`.
    sec = jnp.dot(net.astype(w2_ref.dtype), w2_ref[...],
                  preferred_element_type=jnp.float32)         # [TM, F]

    out_ref[...] = jnp.maximum(skip + sec, 0.0)               # final relu, f32 epilogue


def box_encoder(box_input, packed, *, hidden_size, tm=ROW_TILE):
    """Pallas forward pass. box_input: [B, 10] f32 -> [B, F] f32."""
    B, din = box_input.shape
    H = hidden_size
    F = packed['w2'].shape[1]
    hf = H + F

    num_tiles = pl.cdiv(B, tm)
    Bp = num_tiles * tm
    if Bp != B:  # pad rows so the grid tiles evenly; padded rows are sliced off.
        box_input = jnp.pad(box_input, ((0, Bp - B), (0, 0)))

    kernel = functools.partial(_box_encoder_kernel, hidden=H)

    out = pl.pallas_call(
        kernel,
        out_shape=jax.ShapeDtypeStruct((Bp, F), jnp.float32),
        grid=(num_tiles,),
        in_specs=[
            pl.BlockSpec((tm, din), lambda i: (i, 0)),     # x tile (double-buffered)
            pl.BlockSpec((din, hf), lambda i: (0, 0)),     # fused weights, VMEM-resident
            pl.BlockSpec((1, hf), lambda i: (0, 0)),       # fused biases, VMEM-resident
            pl.BlockSpec((H, F), lambda i: (0, 0)),        # mlp2 weights, VMEM-resident
        ],
        out_specs=pl.BlockSpec((tm, F), lambda i: (i, 0)),
        compiler_params=pltpu.CompilerParams(
            dimension_semantics=("parallel",)),            # megacore-shardable on v7x
    )(box_input, packed['w_fused'], packed['b_fused'], packed['w2'])

    return out[:B]


def init_params(key, box_dim, feature_size, hidden_size):
    """PyTorch-style nn.Linear init (uniform(-1/sqrt(fan_in), 1/sqrt(fan_in)))."""
    ks = jax.random.split(key, 6)

    def lin(kw, kb, fan_in, fan_out):
        bound = 1.0 / jnp.sqrt(fan_in)
        w = jax.random.uniform(kw, (fan_in, fan_out), jnp.float32, -bound, bound)
        b = jax.random.uniform(kb, (fan_out,), jnp.float32, -bound, bound)
        return w, b

    w_skip, b_skip = lin(ks[0], ks[1], box_dim, feature_size)
    w1, b1 = lin(ks[2], ks[3], box_dim, hidden_size)
    w2, b2 = lin(ks[4], ks[5], hidden_size, feature_size)
    return {'w_skip': w_skip, 'b_skip': b_skip,
            'w1': w1, 'b1': b1,
            'w2': w2, 'b2': b2}


def pack_params(params, weight_dtype=jnp.bfloat16):
    """Fuse mlp1/mlp_skip weights + fold b2 into the skip bias; weights -> bf16."""
    w_fused = jnp.concatenate([params['w1'], params['w_skip']], axis=1)
    b_fused = jnp.concatenate([params['b1'], params['b_skip'] + params['b2']],
                              axis=0).reshape(1, -1)
    return {
        'w_fused': w_fused.astype(weight_dtype),   # [10, H+F]
        'b_fused': b_fused.astype(jnp.float32),    # [1, H+F]  (f32 epilogue)
        'w2': params['w2'].astype(weight_dtype),   # [H, F]
    }


def reference_forward(x, params):
    """Pure-JAX f32 reference mirroring the PyTorch BoxEncoder exactly."""
    net = jax.nn.relu(x @ params['w1'] + params['b1'])
    return jax.nn.relu(x @ params['w_skip'] + params['b_skip']
                       + net @ params['w2'] + params['b2'])


if __name__ == "__main__":
    key = jax.random.PRNGKey(0)
    k_in, k_par = jax.random.split(key)

    params = init_params(k_par, BOX_DIM, FEATURE_SIZE, HIDDEN_SIZE)
    packed = pack_params(params)
    box_input = jax.random.normal(k_in, (BATCH, BOX_DIM), jnp.float32)

    out = box_encoder(box_input, packed, hidden_size=HIDDEN_SIZE, tm=ROW_TILE)
    out = jax.block_until_ready(out)

    ref = reference_forward(box_input, params)
    assert out.shape == (BATCH, FEATURE_SIZE)
    # bf16 weights (per perf review) vs f32 reference -> modest tolerance.
    assert jnp.allclose(out, ref, atol=2e-2, rtol=2e-2), "mismatch vs f32 reference"

    print("KERNEL_OK")
</pallas_src>

<mosaic_0001>
module attributes {stable_mosaic.version = 11 : i64} {
  func.func @_box_encoder_kernel(%arg0: i32, %arg1: memref<32x10xf32, #tpu.memory_space<vmem>>, %arg2: memref<10x256xbf16, #tpu.memory_space<vmem>>, %arg3: memref<1x256xf32, #tpu.memory_space<vmem>>, %arg4: memref<128x128xbf16, #tpu.memory_space<vmem>>, %arg5: memref<32x128xf32, #tpu.memory_space<vmem>>) attributes {dimension_semantics = [#tpu.dimension_semantics<parallel>], iteration_bounds = array<i64: 2>, scalar_prefetch = 0 : i64, scratch_operands = 0 : i64, tpu.core_type = #tpu.core_type<tc>, window_params = [{transform_indices = @transform_0, window_bounds = array<i64: 32, 10>}, {pipeline_mode = #tpu.pipeline_mode<synchronous>, transform_indices = @transform_1, window_bounds = array<i64: 10, 256>}, {pipeline_mode = #tpu.pipeline_mode<synchronous>, transform_indices = @transform_2, window_bounds = array<i64: 1, 256>}, {pipeline_mode = #tpu.pipeline_mode<synchronous>, transform_indices = @transform_3, window_bounds = array<i64: 128, 128>}, {transform_indices = @transform_4, window_bounds = array<i64: 32, 128>}]} {
    %c0 = arith.constant 0 : index
    %c0_0 = arith.constant 0 : index
    %0 = vector.load %arg1[%c0, %c0_0] : memref<32x10xf32, #tpu.memory_space<vmem>>, vector<32x10xf32>
    %c0_1 = arith.constant 0 : index
    %c0_2 = arith.constant 0 : index
    %1 = vector.load %arg2[%c0_1, %c0_2] : memref<10x256xbf16, #tpu.memory_space<vmem>>, vector<10x256xbf16>
    %2 = arith.truncf %0 : vector<32x10xf32> to vector<32x10xbf16>
    %cst = arith.constant dense<0.000000e+00> : vector<32x256xf32>
    %3 = tpu.matmul %2, %1, %cst {dimension_numbers = #tpu.dot_dimension_numbers<[1], [0], [0], [1], [0, 0, 1, 1], [], []>} : vector<32x10xbf16>, vector<10x256xbf16>, vector<32x256xf32> -> vector<32x256xf32>
    %c0_3 = arith.constant 0 : index
    %c0_4 = arith.constant 0 : index
    %4 = vector.load %arg3[%c0_3, %c0_4] : memref<1x256xf32, #tpu.memory_space<vmem>>, vector<1x256xf32>
    %5 = vector.broadcast %4 : vector<1x256xf32> to vector<32x256xf32>
    %6 = arith.addf %3, %5 : vector<32x256xf32>
    %7 = vector.extract_strided_slice %6 {offsets = [0, 0], sizes = [32, 128], strides = [1, 1]} : vector<32x256xf32> to vector<32x128xf32>
    %cst_5 = arith.constant 0.000000e+00 : f32
    %8 = vector.broadcast %cst_5 : f32 to vector<32x128xf32>
    %9 = arith.maximumf %7, %8 : vector<32x128xf32>
    %10 = vector.extract_strided_slice %6 {offsets = [0, 128], sizes = [32, 128], strides = [1, 1]} : vector<32x256xf32> to vector<32x128xf32>
    %11 = arith.truncf %9 : vector<32x128xf32> to vector<32x128xbf16>
    %c0_6 = arith.constant 0 : index
    %c0_7 = arith.constant 0 : index
    %12 = vector.load %arg4[%c0_6, %c0_7] : memref<128x128xbf16, #tpu.memory_space<vmem>>, vector<128x128xbf16>
    %cst_8 = arith.constant dense<0.000000e+00> : vector<32x128xf32>
    %13 = tpu.matmul %11, %12, %cst_8 {dimension_numbers = #tpu.dot_dimension_numbers<[1], [0], [0], [1], [0, 0, 1, 1], [], []>} : vector<32x128xbf16>, vector<128x128xbf16>, vector<32x128xf32> -> vector<32x128xf32>
    %14 = arith.addf %10, %13 : vector<32x128xf32>
    %cst_9 = arith.constant 0.000000e+00 : f32
    %15 = vector.broadcast %cst_9 : f32 to vector<32x128xf32>
    %16 = arith.maximumf %14, %15 : vector<32x128xf32>
    %c0_10 = arith.constant 0 : index
    %c0_11 = arith.constant 0 : index
    %17 = vector.load %arg5[%c0_10, %c0_11] : memref<32x128xf32, #tpu.memory_space<vmem>>, vector<32x128xf32>
    tpu.vector_store %arg5[%c0_10, %c0_11], %16 {strides = array<i32>} : memref<32x128xf32, #tpu.memory_space<vmem>>, vector<32x128xf32>,
    return
  }
  func.func @transform_0(%arg0: i32) -> (i32, i32) {
    %c0_i32 = arith.constant 0 : i32
    %c0_i32_0 = arith.constant 0 : i32
    return %arg0, %c0_i32 : i32, i32
  }
  func.func @transform_1(%arg0: i32) -> (i32, i32) {
    %c0_i32 = arith.constant 0 : i32
    %c0_i32_0 = arith.constant 0 : i32
    %c0_i32_1 = arith.constant 0 : i32
    return %c0_i32, %c0_i32_0 : i32, i32
  }
  func.func @transform_2(%arg0: i32) -> (i32, i32) {
    %c0_i32 = arith.constant 0 : i32
    %c0_i32_0 = arith.constant 0 : i32
    %c0_i32_1 = arith.constant 0 : i32
    return %c0_i32, %c0_i32_0 : i32, i32
  }
  func.func @transform_3(%arg0: i32) -> (i32, i32) {
    %c0_i32 = arith.constant 0 : i32
    %c0_i32_0 = arith.constant 0 : i32
    %c0_i32_1 = arith.constant 0 : i32
    return %c0_i32, %c0_i32_0 : i32, i32
  }
  func.func @transform_4(%arg0: i32) -> (i32, i32) {
    %c0_i32 = arith.constant 0 : i32
    %c0_i32_0 = arith.constant 0 : i32
    return %arg0, %c0_i32 : i32, i32
  }
}

</mosaic_0001>

<llo_original>
// kernel: tpu_custom_call.1
$region0: #{tpu_custom_call.1}
  #allocation0 [shape = 'u32[]', space=smem, size = 0x4, offset = 0x4, fixed_abs, tag = 'smem constant byte address 0x4 - core index']
  #allocation1 [shape = 'u32[144,128]{1,0:T(1,128)}', space=vmem, size = 0x12000, scoped, tag = 'internal scratch']
  %s0 = inlined_call_operand.vmem [shape: f32[64,10], index: 0, kind: input, shape index: {}]
  %s1 = inlined_call_operand.vmem [shape: bf16[10,256], index: 1, kind: input, shape index: {}]
  %s2 = inlined_call_operand.vmem [shape: f32[1,256], index: 2, kind: input, shape index: {}]
  %s3 = inlined_call_operand.vmem [shape: bf16[128,128], index: 3, kind: input, shape index: {}]
  %s4 = inlined_call_operand.hbm [shape: f32[64,128], index: 4, kind: output, shape index: {}]
  %s5 = sld [smem:[#allocation0]]
  $region49: #{tpu_custom_call.1} parent=0
    _
  %s7 = ssub.s32 1, %s5
  %s8 = scalar_select 0, %s7, %s5
  $region1: #{tpu_custom_call.1} parent=0
    #allocation2 [shape = 'u8[32768]{0}', space=vmem, size = 0x8000, scoped, tag = 'output window, operand 0']
    #allocation3 [shape = 's32[2]{0}', space=sflag, size = 0x8, scoped, tag = 'scoped memory for tpu_custom_call.1']
    %9 = vsyncpa [#allocation3], 0
    %s10 = scalar_lea.sflag [#allocation3], 1
    %11 = vsyncpa %s10, 0
    loop: start=0, step=1, limit=4
    $region2: #{tpu_custom_call.1} parent=1 // loop_pre_header
      _
    $region3: #{tpu_custom_call.1} parent=1 // loop_header
      %s13 = sphi 0, %s17
      %p14 = scmp.ge.s32.totalorder %s13, 4
      %s23 = sphi 0, %s25
      %s26 = sphi 0, %s23
      %s27 = sphi 0, %s26
      %s43 = sphi 0, %s27
      %s47 = sphi 0, %s47
      %s49 = sphi 0, %s47
      %s50 = sphi 0, %s49
      %s64 = sphi 0, %s50
      %s68 = sphi 0, %s68
      %s70 = sphi 0, %s68
      %s71 = sphi 0, %s70
      %s85 = sphi 0, %s71
      %s89 = sphi 0, %s89
      %s91 = sphi 0, %s89
      %s92 = sphi 0, %s91
      %s106 = sphi 0, %s92
      %s112 = sphi 0, %s114
      %s115 = sphi 0, %s112
      %s116 = sphi 0, %s115
      %s132 = sphi 0, %s116
    $region4: #{tpu_custom_call.1} parent=1 // loop_header_branch
      %16 = sbr.rel (%p14) target = $region8
    $region5: #{tpu_custom_call.1} parent=1 // loop_body
      %s18 = ssub.s32 %s13, 1
      %s19 = ssub.s32 %s13, 2
      %s20 = sadd.s32 %s13, 1
      %s21 = ssub.s32 %s13, %s20
      %p22 = scmp.eq.s32.totalorder %s21, 0
      %s24 = sadd.s32 %s23, 1
      %s25 = scalar_select %p22, %s23, %s24
      %p28 = pneg %p22
      %p29 = scmp.eq.s32.totalorder %s13, 1
      %p30 = por %p28, %p29
      %p31 = scmp.ne.s32.totalorder %s23, %s26
      %p32 = scmp.eq.s32.totalorder %s13, 0
      %p33 = por %p31, %p32
      %p34 = scmp.ne.s32.totalorder %s23, %s26
      %p35 = scmp.eq.s32.totalorder %s18, 1
      %p36 = por %p34, %p35
      %p37 = scmp.ne.s32.totalorder %s26, %s27
      %p38 = scmp.eq.s32.totalorder %s18, 0
      %p39 = por %p37, %p38
      %p40 = scmp.ne.s32.totalorder %s26, %s27
      %p41 = scmp.eq.s32.totalorder %s19, 1
      %p42 = por %p40, %p41
      %p44 = scmp.ne.s32.totalorder %s27, %s43
      %p45 = scmp.eq.s32.totalorder %s19, 0
      %p46 = por %p44, %p45
      %s48 = sadd.s32 %s47, 1
      %p51 = scmp.eq.s32.totalorder %s13, 1
      %p52 = scmp.ne.s32.totalorder %s47, %s49
      %p53 = scmp.eq.s32.totalorder %s13, 0
      %p54 = por %p52, %p53
      %p55 = scmp.ne.s32.totalorder %s47, %s49
      %p56 = scmp.eq.s32.totalorder %s18, 1
      %p57 = por %p55, %p56
      %p58 = scmp.ne.s32.totalorder %s49, %s50
      %p59 = scmp.eq.s32.totalorder %s18, 0
      %p60 = por %p58, %p59
      %p61 = scmp.ne.s32.totalorder %s49, %s50
      %p62 = scmp.eq.s32.totalorder %s19, 1
      %p63 = por %p61, %p62
      %p65 = scmp.ne.s32.totalorder %s50, %s64
      %p66 = scmp.eq.s32.totalorder %s19, 0
      %p67 = por %p65, %p66
      %s69 = sadd.s32 %s68, 1
      %p72 = scmp.eq.s32.totalorder %s13, 1
      %p73 = scmp.ne.s32.totalorder %s68, %s70
      %p74 = scmp.eq.s32.totalorder %s13, 0
      %p75 = por %p73, %p74
      %p76 = scmp.ne.s32.totalorder %s68, %s70
      %p77 = scmp.eq.s32.totalorder %s18, 1
      %p78 = por %p76, %p77
      %p79 = scmp.ne.s32.totalorder %s70, %s71
      %p80 = scmp.eq.s32.totalorder %s18, 0
      %p81 = por %p79, %p80
      %p82 = scmp.ne.s32.totalorder %s70, %s71
      %p83 = scmp.eq.s32.totalorder %s19, 1
      %p84 = por %p82, %p83
      %p86 = scmp.ne.s32.totalorder %s71, %s85
      %p87 = scmp.eq.s32.totalorder %s19, 0
      %p88 = por %p86, %p87
      %s90 = sadd.s32 %s89, 1
      %p93 = scmp.eq.s32.totalorder %s13, 1
      %p94 = scmp.ne.s32.totalorder %s89, %s91
      %p95 = scmp.eq.s32.totalorder %s13, 0
      %p96 = por %p94, %p95
      %p97 = scmp.ne.s32.totalorder %s89, %s91
      %p98 = scmp.eq.s32.totalorder %s18, 1
      %p99 = por %p97, %p98
      %p100 = scmp.ne.s32.totalorder %s91, %s92
      %p101 = scmp.eq.s32.totalorder %s18, 0
      %p102 = por %p100, %p101
      %p103 = scmp.ne.s32.totalorder %s91, %s92
      %p104 = scmp.eq.s32.totalorder %s19, 1
      %p105 = por %p103, %p104
      %p107 = scmp.ne.s32.totalorder %s92, %s106
      %p108 = scmp.eq.s32.totalorder %s19, 0
      %p109 = por %p107, %p108
      %s110 = ssub.s32 %s13, %s20
      %p111 = scmp.eq.s32.totalorder %s110, 0
      %s113 = sadd.s32 %s112, 1
      %s114 = scalar_select %p111, %s112, %s113
      %p117 = pneg %p111
      %p118 = scmp.eq.s32.totalorder %s13, 1
      %p119 = por %p117, %p118
      %p120 = scmp.ne.s32.totalorder %s112, %s115
      %p121 = scmp.eq.s32.totalorder %s13, 0
      %p122 = por %p120, %p121
      %p123 = scmp.ne.s32.totalorder %s112, %s115
      %p124 = scmp.eq.s32.totalorder %s18, 1
      %p125 = por %p123, %p124
      %p126 = scmp.ne.s32.totalorder %s115, %s116
      %p127 = scmp.eq.s32.totalorder %s18, 0
      %p128 = por %p126, %p127
      %p129 = scmp.ne.s32.totalorder %s115, %s116
      %p130 = scmp.eq.s32.totalorder %s19, 1
      %p131 = por %p129, %p130
      %p133 = scmp.ne.s32.totalorder %s116, %s132
      %p134 = scmp.eq.s32.totalorder %s19, 0
      %p135 = por %p133, %p134
      %p136 = scmp.le.s32.totalorder 1, %s13
      %p137 = scmp.lt.s32.totalorder %s13, 3
      %p138 = pnand %p136, %p137
      %p139 = pneg %p138
      // Predicated region
      $region9: #{tpu_custom_call.1} parent=5 // pred_check
        _
      $region10: #{tpu_custom_call.1} parent=5 // pred_check_branch
        %141 = sbr.rel (%p138) target = $region12
      $region11: #{tpu_custom_call.1} parent=5 // pred_region
        %s142 = ssub.s32 %s13, 1
        // Predicated region
        $region13: #{tpu_custom_call.1} parent=11 // pred_check
          %p143 = pneg %p60
        $region14: #{tpu_custom_call.1} parent=11 // pred_check_branch
          %145 = sbr.rel (%p143) target = $region16
        $region15: #{tpu_custom_call.1} parent=11 // pred_region
          _
        $region16: #{tpu_custom_call.1} parent=11 // pred_fallthru
          _
        // Predicated region
        $region17: #{tpu_custom_call.1} parent=11 // pred_check
          %p146 = pneg %p81
        $region18: #{tpu_custom_call.1} parent=11 // pred_check_branch
          %148 = sbr.rel (%p146) target = $region20
        $region19: #{tpu_custom_call.1} parent=11 // pred_region
          _
        $region20: #{tpu_custom_call.1} parent=11 // pred_fallthru
          _
        // Predicated region
        $region21: #{tpu_custom_call.1} parent=11 // pred_check
          %p149 = pneg %p102
        $region22: #{tpu_custom_call.1} parent=11 // pred_check_branch
          %151 = sbr.rel (%p149) target = $region24
        $region23: #{tpu_custom_call.1} parent=11 // pred_region
          _
        $region24: #{tpu_custom_call.1} parent=11 // pred_fallthru
          _
      $region12: #{tpu_custom_call.1} parent=5 // pred_fallthru
        _
      %p152 = scmp.lt.s32.totalorder %s13, 2
      // Predicated region
      $region25: #{tpu_custom_call.1} parent=5 // pred_check
        %p153 = pneg %p152
      $region26: #{tpu_custom_call.1} parent=5 // pred_check_branch
        %155 = sbr.rel (%p153) target = $region28
      $region27: #{tpu_custom_call.1} parent=5 // pred_region
        // Predicated region
        $region29: #{tpu_custom_call.1} parent=27 // pred_check
          %p156 = pneg %p33
        $region30: #{tpu_custom_call.1} parent=27 // pred_check_branch
          %158 = sbr.rel (%p156) target = $region32
        $region31: #{tpu_custom_call.1} parent=27 // pred_region
          %s159 = smul.u32 4, %s13
          %p160 = scmp.lt.s32.totalorder %s159, 7
          %s161 = scalar_select %p160, %s159, 7
          %s162 = smul.addr %s161, 8
          %s163 = scalar_lea.vmem %s0, %s162
          %s164 = smul.u32 4, %s13
        $region32: #{tpu_custom_call.1} parent=27 // pred_fallthru
          _
      $region28: #{tpu_custom_call.1} parent=5 // pred_fallthru
        _
      %p165 = scmp.le.s32.totalorder 1, %s13
      %p166 = scmp.lt.s32.totalorder %s13, 3
      %p167 = pnand %p165, %p166
      %p168 = pneg %p167
      // Predicated region
      $region33: #{tpu_custom_call.1} parent=5 // pred_check
        _
      $region34: #{tpu_custom_call.1} parent=5 // pred_check_branch
        %170 = sbr.rel (%p167) target = $region36
      $region35: #{tpu_custom_call.1} parent=5 // pred_region
        %s171 = ssub.s32 %s13, 1
        %s172 = smul.u32 4, %s18
        %p173 = scmp.lt.s32.totalorder %s172, 7
        %s174 = scalar_select %p173, %s172, 7
        %s175 = smul.addr %s174, 8
        %s176 = scalar_lea.vmem %s0, %s175
        %p177 = pneg %p39
        %p178 = pneg %p36
        %p179 = pneg %p60
        %p180 = pneg %p57
        %p181 = pneg %p81
        %p182 = pneg %p78
        %p183 = pneg %p102
        %p184 = pneg %p99
        %p185 = pneg %p128
        %p186 = pneg %p125
        %s187 = sand.u32 %s115, 1
        %s188 = scalar_lea.sflag [#allocation3], %s187
        %s189 = sand.u32 %s115, 1
        %s190 = smul.addr %s189, 32
        %s191 = scalar_lea.vmem [#allocation2], %s190
        %s192 = smul.u32 4, %s18
        %p193 = scmp.lt.s32.totalorder %s192, 7
        %s194 = scalar_select %p193, %s192, 7
        %s195 = smul.addr %s194, 8
        %s196 = scalar_lea.vmem %s0, %s195
        %s197 = smul.u32 4, %s18
        %s198 = smul.u32 4, %s18
        %v200 = vld [vmem:[%s196] sm:$0xff]
        %v201 = vld [vmem:[%s196 + $0x8] sm:$0xff]
        %v202 = vld [vmem:[%s196 + $0x10] sm:$0xff]
        %v203 = vld [vmem:[%s196 + $0x18] sm:$0xff]
        %v204 = vld [vmem:[%s1] sm:$0xff]
        %v205 = vld [vmem:[%s1 + $0x8] sm:$0x11]
        %v206 = vpack.c.bf16 %v201, %v200
        %v207 = vpack.c.bf16 %v203, %v202
        %v208 = vld [vmem:[%s2] sm:$0x3]
        %v210 = vlaneseq
        %v211 = vshrl.u32 %v210, 7
        %v212 = vsub.s32 0, %v211
        %v213 = vrot.slane %v208, %v212
        %v214 = vlaneseq
        %v215 = vshrl.u32 %v214, 7
        %v216 = vsub.s32 1, %v215
        %v217 = vrot.slane %v208, %v216
        %v222 = vunpack.c.l.b16 %v204
        %v223 = vunpack.c.h.b16 %v204
        %v224 = vunpack.c.l.b16 %v205
        %v225 = vunpack.c.h.b16 %v205
        %v226 = vpack.c.b16 %v224, %v222
        %v227 = vpack.c.b16 %v225, %v223
        %vm228 = vcmask 80896
        %v230 = vsel %vm228, %v206, 0
        %v233 = vsel %vm228, %v207, 0
        %vm235 = vcmask 1044480
        %v237 = vsel %vm235, %v226, 0
        %v240 = vsel %vm235, %v227, 0
        %242 = vmatprep.subr.bf16.mxu0 %v240
        %243 = vmatpush1.bf16.msra.mxu0 %v237
        %244 = vmatprep.subr.bf16.mxu0 0
        %245 = vmatpush1.bf16.msra.mxu0 0
        %246 = vmatprep.subr.bf16.mxu0 0
        %247 = vmatpush1.bf16.msra.mxu0 0
        %248 = vmatprep.subr.bf16.mxu0 0
        %249 = vmatpush1.bf16.msra.mxu0 0
        %250 = vmatprep.subr.bf16.mxu0 0
        %251 = vmatpush1.bf16.msra.mxu0 0
        %252 = vmatprep.subr.bf16.mxu0 0
        %253 = vmatpush1.bf16.msra.mxu0 0
        %254 = vmatprep.subr.bf16.mxu0 0
        %255 = vmatpush1.bf16.msra.mxu0 0
        %256 = vmatprep.subr.bf16.mxu0 0
        %257 = vmatpush1.bf16.msra.mxu0 0
        %258 = vmatprep.subr.bf16.mxu0 0
        %259 = vmatpush1.bf16.msra.mxu0 0
        %260 = vmatprep.subr.bf16.mxu0 0
        %261 = vmatpush1.bf16.msra.mxu0 0
        %262 = vmatprep.subr.bf16.mxu0 0
        %263 = vmatpush1.bf16.msra.mxu0 0
        %264 = vmatprep.subr.bf16.mxu0 0
        %265 = vmatpush1.bf16.msra.mxu0 0
        %266 = vmatprep.subr.bf16.mxu0 0
        %267 = vmatpush1.bf16.msra.mxu0 0
        %268 = vmatprep.subr.bf16.mxu0 0
        %269 = vmatpush1.bf16.msra.mxu0 0
        %270 = vmatprep.subr.bf16.mxu0 0
        %271 = vmatpush1.bf16.msra.mxu0 0
        %272 = vmatprep.subr.bf16.mxu0 0
        %273 = vmatpush1.bf16.msra.mxu0 0
        %274 = vmatprep.mubr.bf16.mxu0 0
        %275 = vmatmul.mubr.bf16.gmra.mrb[0].mxu0 %v230
        %v276 = vpop.f32.mrb[0].mxu0
        %v277 = vadd.f32 %v213, %v276
        %v278 = vpop.f32.mrb[0].mxu0
        %v279 = vadd.f32 %v217, %v278
        %v280 = vpop.f32.mrb[0].mxu0
        %v281 = vadd.f32 %v213, %v280
        %v282 = vpop.f32.mrb[0].mxu0
        %v283 = vadd.f32 %v217, %v282
        %284 = vmatprep.mubr.bf16.mxu0 0
        %285 = vmatmul.mubr.bf16.gmra.mrb[0].mxu0 %v233
        %v286 = vpop.f32.mrb[0].mxu0
        %v287 = vadd.f32 %v213, %v286
        %v288 = vpop.f32.mrb[0].mxu0
        %v289 = vadd.f32 %v217, %v288
        %v290 = vpop.f32.mrb[0].mxu0
        %v291 = vadd.f32 %v213, %v290
        %v292 = vpop.f32.mrb[0].mxu0
        %v293 = vadd.f32 %v217, %v292
        %294 = vdwg.mxu0
        %v295 = vmax.f32 %v277, 0.0
        %v296 = vmax.f32 %v281, 0.0
        %v297 = vmax.f32 %v287, 0.0
        %v298 = vmax.f32 %v291, 0.0
        %v299 = vpack.c.bf16 %v296, %v295
        %v300 = vpack.c.bf16 %v298, %v297
        %v301 = vld [vmem:[%s3] sm:$0xf]
        %v302 = vld [vmem:[%s3 + $0x4] sm:$0xf]
        %v303 = vld [vmem:[%s3 + $0x8] sm:$0xf]
        %v304 = vld [vmem:[%s3 + $0xc] sm:$0xf]
        %v305 = vld [vmem:[%s3 + $0x10] sm:$0xf]
        %v306 = vld [vmem:[%s3 + $0x14] sm:$0xf]
        %v307 = vld [vmem:[%s3 + $0x18] sm:$0xf]
        %v308 = vld [vmem:[%s3 + $0x1c] sm:$0xf]
        %v309 = vld [vmem:[%s3 + $0x20] sm:$0xf]
        %v310 = vld [vmem:[%s3 + $0x24] sm:$0xf]
        %v311 = vld [vmem:[%s3 + $0x28] sm:$0xf]
        %v312 = vld [vmem:[%s3 + $0x2c] sm:$0xf]
        %v313 = vld [vmem:[%s3 + $0x30] sm:$0xf]
        %v314 = vld [vmem:[%s3 + $0x34] sm:$0xf]
        %v315 = vld [vmem:[%s3 + $0x38] sm:$0xf]
        %v316 = vld [vmem:[%s3 + $0x3c] sm:$0xf]
        %v333 = vunpack.c.l.b16 %v301
        %v334 = vunpack.c.l.b16 %v302
        %v335 = vunpack.c.l.b16 %v303
        %v336 = vunpack.c.l.b16 %v304
        %v337 = vunpack.c.l.b16 %v305
        %v338 = vunpack.c.l.b16 %v306
        %v339 = vunpack.c.l.b16 %v307
        %v340 = vunpack.c.l.b16 %v308
        %v341 = vunpack.c.l.b16 %v309
        %v342 = vunpack.c.l.b16 %v310
        %v343 = vunpack.c.l.b16 %v311
        %v344 = vunpack.c.l.b16 %v312
        %v345 = vunpack.c.l.b16 %v313
        %v346 = vunpack.c.l.b16 %v314
        %v347 = vunpack.c.l.b16 %v315
        %v348 = vunpack.c.l.b16 %v316
        %v349 = vpack.c.b16 %v334, %v333
        %v350 = vpack.c.b16 %v336, %v335
        %v351 = vpack.c.b16 %v338, %v337
        %v352 = vpack.c.b16 %v340, %v339
        %v353 = vpack.c.b16 %v342, %v341
        %v354 = vpack.c.b16 %v344, %v343
        %v355 = vpack.c.b16 %v346, %v345
        %v356 = vpack.c.b16 %v348, %v347
        %365 = vmatprep.subr.bf16.mxu0 0
        %366 = vmatpush1.bf16.msra.mxu0 %v349
        %367 = vmatprep.subr.bf16.mxu0 0
        %368 = vmatpush1.bf16.msra.mxu0 %v350
        %369 = vmatprep.subr.bf16.mxu0 0
        %370 = vmatpush1.bf16.msra.mxu0 %v351
        %371 = vmatprep.subr.bf16.mxu0 0
        %372 = vmatpush1.bf16.msra.mxu0 %v352
        %373 = vmatprep.subr.bf16.mxu0 0
        %374 = vmatpush1.bf16.msra.mxu0 %v353
        %375 = vmatprep.subr.bf16.mxu0 0
        %376 = vmatpush1.bf16.msra.mxu0 %v354
        %377 = vmatprep.subr.bf16.mxu0 0
        %378 = vmatpush1.bf16.msra.mxu0 %v355
        %379 = vmatprep.subr.bf16.mxu0 0
        %380 = vmatpush1.bf16.msra.mxu0 %v356
        %381 = vmatprep.subr.bf16.mxu0 0
        %382 = vmatpush1.bf16.msra.mxu0 0
        %383 = vmatprep.subr.bf16.mxu0 0
        %384 = vmatpush1.bf16.msra.mxu0 0
        %385 = vmatprep.subr.bf16.mxu0 0
        %386 = vmatpush1.bf16.msra.mxu0 0
        %387 = vmatprep.subr.bf16.mxu0 0
        %388 = vmatpush1.bf16.msra.mxu0 0
        %389 = vmatprep.subr.bf16.mxu0 0
        %390 = vmatpush1.bf16.msra.mxu0 0
        %391 = vmatprep.subr.bf16.mxu0 0
        %392 = vmatpush1.bf16.msra.mxu0 0
        %393 = vmatprep.subr.bf16.mxu0 0
        %394 = vmatpush1.bf16.msra.mxu0 0
        %395 = vmatprep.subr.bf16.mxu0 0
        %396 = vmatpush1.bf16.msra.mxu0 0
        %397 = vmatprep.mubr.bf16.mxu0 0
        %398 = vmatmul.mubr.bf16.gmra.mrb[0].mxu0 %v299
        %v399 = vpop.f32.mrb[0].mxu0
        %v400 = vadd.f32 0.0, %v399
        %v401 = vpop.f32.mrb[0].mxu0
        %v402 = vpop.f32.mrb[0].mxu0
        %v403 = vadd.f32 0.0, %v402
        %v404 = vpop.f32.mrb[0].mxu0
        %405 = vmatprep.mubr.bf16.mxu0 0
        %406 = vmatmul.mubr.bf16.gmra.mrb[0].mxu0 %v300
        %v407 = vpop.f32.mrb[0].mxu0
        %v408 = vadd.f32 0.0, %v407
        %v409 = vpop.f32.mrb[0].mxu0
        %v410 = vpop.f32.mrb[0].mxu0
        %v411 = vadd.f32 0.0, %v410
        %v412 = vpop.f32.mrb[0].mxu0
        %413 = vdwg.mxu0
        %v414 = vadd.f32 %v279, %v400
        %v415 = vadd.f32 %v283, %v403
        %v416 = vadd.f32 %v289, %v408
        %v417 = vadd.f32 %v293, %v411
        %v418 = vmax.f32 %v414, 0.0
        %v419 = vmax.f32 %v415, 0.0
        %v420 = vmax.f32 %v416, 0.0
        %v421 = vmax.f32 %v417, 0.0
        %422 = vst [vmem:[%s191] sm:$0xff] %v418
        %423 = vst [vmem:[%s191 + $0x8] sm:$0xff] %v419
        %424 = vst [vmem:[%s191 + $0x10] sm:$0xff] %v420
        %425 = vst [vmem:[%s191 + $0x18] sm:$0xff] %v421
        %s426 = sand.u32 %s115, 1
        %s427 = scalar_lea.sflag [#allocation3], %s426
        %s428 = sand.u32 %s115, 1
        %s429 = smul.addr %s428, 32
        %s430 = scalar_lea.vmem [#allocation2], %s429
        // Predicated region
        $region37: #{tpu_custom_call.1} parent=35 // pred_check
          %p431 = pneg %p125
        $region38: #{tpu_custom_call.1} parent=35 // pred_check_branch
          %433 = sbr.rel (%p431) target = $region40
        $region39: #{tpu_custom_call.1} parent=35 // pred_region
          %s434 = smul.u32 4, %s18
          %s436 = ssub.s32 512, 512
          %437 = vsyncadd %s427, %s436
          %s438 = smul.addr %s434, 128
          %s439 = scalar_lea.hbm %s4, %s438
          %s440 = sshll.u32 %s430, 4
          %s441 = int_to_ptr.vmem [resolvable:$true] %s440
          %446 = dma.vmem_to_hbm [thread:$0]  %s441, 512, %s439, %s427, 128, 128, 8
        $region40: #{tpu_custom_call.1} parent=35 // pred_fallthru
          _
      $region36: #{tpu_custom_call.1} parent=5 // pred_fallthru
        _
      %p447 = scmp.le.s32.totalorder 2, %s13
      // Predicated region
      $region41: #{tpu_custom_call.1} parent=5 // pred_check
        %p448 = pneg %p447
      $region42: #{tpu_custom_call.1} parent=5 // pred_check_branch
        %450 = sbr.rel (%p448) target = $region44
      $region43: #{tpu_custom_call.1} parent=5 // pred_region
        %s451 = ssub.s32 %s13, 2
        // Predicated region
        $region45: #{tpu_custom_call.1} parent=43 // pred_check
          %p452 = pneg %p131
        $region46: #{tpu_custom_call.1} parent=43 // pred_check_branch
          %454 = sbr.rel (%p452) target = $region48
        $region47: #{tpu_custom_call.1} parent=43 // pred_region
          %s455 = sand.u32 %s116, 1
          %s456 = scalar_lea.sflag [#allocation3], %s455
          %s457 = sand.u32 %s116, 1
          %s458 = smul.addr %s457, 32
          %s459 = scalar_lea.vmem [#allocation2], %s458
          %460 = dma.done %s456, 512
        $region48: #{tpu_custom_call.1} parent=43 // pred_fallthru
          _
      $region44: #{tpu_custom_call.1} parent=5 // pred_fallthru
        _
    $region6: #{tpu_custom_call.1} parent=1 // loop_footer
      %s17 = sadd.s32 1, %s13
    $region7: #{tpu_custom_call.1} parent=1 // loop_footer_branch
      %12 = sbr.rel target = $region3
    $region8: #{tpu_custom_call.1} parent=1 // loop_exit
      _
    %461 = vsyncpa [#allocation3], 1
    %s462 = scalar_lea.sflag [#allocation3], 1
    %463 = vsyncpa %s462, 1

</llo_original>
